<compile_context>
chip_gen: v7x
topology: tpu7x:2x2x1
jax: 0.10.0
libtpu: 0.0.40
codegen_flags: <defaults>
</compile_context>

<pallas_src>
import functools

import jax
import jax.numpy as jnp
from jax.experimental import pallas as pl
from jax.experimental.pallas import tpu as pltpu

LN_EPS = 1e-5


def _round_up(a, b):
    return (a + b - 1) // b * b


def _device_vmem_bytes():
    try:
        return int(pltpu.get_tpu_info().vmem_capacity_bytes)
    except Exception:
        return 64 * 1024 * 1024  # conservative (v7x per-TC) fallback


def _layer_norm(z, gamma, beta, inv_d, n_pad):
    # Padded feature columns of z are exactly zero (x, w2^T cols, b2 all
    # zero-padded), so the plain lane-sum of z equals the sum over the true
    # d_in columns. The centred sum-of-squares over-counts the n_pad zero
    # columns by n_pad*mu^2; subtract that out (exact, and more accurate than
    # the E[z^2]-mu^2 form).
    s1 = jnp.sum(z, axis=-1, keepdims=True)
    mu = s1 * inv_d
    zc = z - mu
    ss = jnp.sum(zc * zc, axis=-1, keepdims=True) - n_pad * (mu * mu)
    var = jnp.maximum(ss * inv_d, 0.0)
    # Padded gamma/beta columns are zero => padded output columns are zero.
    return zc * jax.lax.rsqrt(var + LN_EPS) * gamma + beta


def ffn_resident_kernel(x_ref, w1_ref, b1_ref, w2_ref, lnp_ref, o_ref, *,
                        inv_d, n_pad):
    """Both weights resident in VMEM; one grid axis over row tiles."""
    x = x_ref[...].astype(jnp.float32)          # residual / LN path stays f32
    xb = x.astype(jnp.bfloat16)                 # MXU operand

    h = jnp.dot(xb, w1_ref[...], preferred_element_type=jnp.float32) + b1_ref[...]
    h = jnp.maximum(h, 0.0)
    y = jnp.dot(h.astype(jnp.bfloat16), w2_ref[...],
                preferred_element_type=jnp.float32)

    # TODO(synk): dropout is identity here (eval mode); training-mode dropout
    # would need pltpu.prng_seed + pltpu.stateful_bernoulli.
    lnp = lnp_ref[...]                           # (3, Dp_in): b2, gamma, beta
    z = y + lnp[0:1, :] + x                      # b2 kept: not cancelled by LN
    o_ref[...] = _layer_norm(z, lnp[1:2, :], lnp[2:3, :],
                             inv_d, n_pad).astype(o_ref.dtype)


def ffn_stream_kernel(x_ref, w1_ref, b1_ref, w2_ref, lnp_ref, o_ref, acc_ref, *,
                      inv_d, n_pad):
    """d_hid-streaming path: grid = (row tiles, hidden chunks); weights are
    streamed per hidden chunk and y is accumulated in an f32 scratch."""
    k = pl.program_id(1)

    @pl.when(k == 0)
    def _():
        acc_ref[...] = jnp.zeros_like(acc_ref)

    xb = x_ref[...].astype(jnp.bfloat16)
    h = jnp.dot(xb, w1_ref[...], preferred_element_type=jnp.float32) + b1_ref[...]
    h = jnp.maximum(h, 0.0)
    acc_ref[...] += jnp.dot(h.astype(jnp.bfloat16), w2_ref[...],
                            preferred_element_type=jnp.float32)

    @pl.when(k == pl.num_programs(1) - 1)
    def _():
        x = x_ref[...].astype(jnp.float32)
        lnp = lnp_ref[...]
        z = acc_ref[...] + lnp[0:1, :] + x
        o_ref[...] = _layer_norm(z, lnp[1:2, :], lnp[2:3, :],
                                 inv_d, n_pad).astype(o_ref.dtype)


def prepare_ffn_params(w1, b1, w2, b2, gamma, beta):
    """One-time weight prep (transpose + 128-pad + bf16 cast), hoisted out of
    the per-call path so repeated forward calls never re-stream the weights.
    Conv1d(k=1) weights are (out, in); we transpose so the kernel does plain
    [rows, in] @ [in, out] contractions."""
    d_hid, d_in = w1.shape
    Dp_in = _round_up(d_in, 128)
    Dp_hid = _round_up(d_hid, 128)

    w1_t = jnp.pad(jnp.transpose(w1).astype(jnp.float32),
                   ((0, Dp_in - d_in), (0, Dp_hid - d_hid))).astype(jnp.bfloat16)
    w2_t = jnp.pad(jnp.transpose(w2).astype(jnp.float32),
                   ((0, Dp_hid - d_hid), (0, Dp_in - d_in))).astype(jnp.bfloat16)
    b1_r = jnp.pad(b1.astype(jnp.float32), (0, Dp_hid - d_hid)).reshape(1, Dp_hid)
    # Pack b2 / gamma / beta into a single pipelined operand (3, Dp_in).
    lnp = jnp.stack([
        jnp.pad(b2.astype(jnp.float32), (0, Dp_in - d_in)),
        jnp.pad(gamma.astype(jnp.float32), (0, Dp_in - d_in)),
        jnp.pad(beta.astype(jnp.float32), (0, Dp_in - d_in)),
    ], axis=0)
    return w1_t, b1_r, w2_t, lnp, int(d_in), int(d_hid)


@functools.partial(jax.jit, static_argnames=("d_in", "tm", "th", "force_stream",
                                             "single_buffer_invariants"))
def ffn_forward(x, w1_t, b1_r, w2_t, lnp, *, d_in, tm=512, th=512,
                force_stream=False, single_buffer_invariants=True):
    B, L, d_last = x.shape
    assert d_last == d_in
    M = B * L
    Dp_in, Dp_hid = w1_t.shape
    act_bytes = jnp.dtype(x.dtype).itemsize

    # Row tile: multiple of sublane packing (8 rows f32 / 16 rows bf16),
    # shrunk for tiny M, default 512 to amortize per-grid-step overhead.
    row_min = 16 if act_bytes < 4 else 8
    tm_eff = _round_up(min(tm, _round_up(M, row_min)), row_min)
    M_pad = _round_up(M, tm_eff)

    x2d = x.reshape(M, d_in)
    needs_pad = (M_pad != M) or (Dp_in != d_in)
    if needs_pad:
        x2d = jnp.pad(x2d, ((0, M_pad - M), (0, Dp_in - d_in)))

    inv_d = 1.0 / d_in
    n_pad = float(Dp_in - d_in)

    dev_vmem = _device_vmem_bytes()

    # Invariant operands: constant index map => never re-fetched; a single
    # VMEM buffer suffices (halves resident weight VMEM).
    inv_kwargs = ({"pipeline_mode": pl.Buffered(buffer_count=1)}
                  if single_buffer_invariants else {})
    wbuf = 1 if single_buffer_invariants else 2

    resident_est = (
        4 * tm_eff * Dp_in * act_bytes            # x + out tiles, double-buffered
        + wbuf * 2 * Dp_in * Dp_hid * 2           # both bf16 weights
        + wbuf * 8 * (Dp_hid + Dp_in) * 4         # b1 + packed LN params (8-row pad)
        + tm_eff * Dp_hid * 6                     # h (f32 + bf16 copy)
        + tm_eff * Dp_in * 18                     # xb + y/z/zc/out temporaries
    )
    use_stream = force_stream or (resident_est > int(0.75 * dev_vmem))

    if not use_stream:
        kernel = functools.partial(ffn_resident_kernel, inv_d=inv_d, n_pad=n_pad)
        grid = (M_pad // tm_eff,)
        in_specs = [
            pl.BlockSpec((tm_eff, Dp_in), lambda i: (i, 0)),                 # x rows
            pl.BlockSpec((Dp_in, Dp_hid), lambda i: (0, 0), **inv_kwargs),   # w1^T
            pl.BlockSpec((1, Dp_hid), lambda i: (0, 0), **inv_kwargs),       # b1
            pl.BlockSpec((Dp_hid, Dp_in), lambda i: (0, 0), **inv_kwargs),   # w2^T
            pl.BlockSpec((3, Dp_in), lambda i: (0, 0), **inv_kwargs),        # b2/g/beta
        ]
        out_specs = pl.BlockSpec((tm_eff, Dp_in), lambda i: (i, 0))
        scratch_shapes = []
        dim_sem = ("parallel",)
        bytes_est = resident_est
    else:
        # Hidden-dim streaming (needed on v7x for real transformer sizes).
        th_eff = min(_round_up(min(th, Dp_hid), 128), Dp_hid)
        while Dp_hid % th_eff:
            th_eff -= 128
        kernel = functools.partial(ffn_stream_kernel, inv_d=inv_d, n_pad=n_pad)
        grid = (M_pad // tm_eff, Dp_hid // th_eff)
        in_specs = [
            pl.BlockSpec((tm_eff, Dp_in), lambda i, k: (i, 0)),              # x rows
            pl.BlockSpec((Dp_in, th_eff), lambda i, k: (0, k)),              # w1^T chunk
            pl.BlockSpec((1, th_eff), lambda i, k: (0, k)),                  # b1 chunk
            pl.BlockSpec((th_eff, Dp_in), lambda i, k: (k, 0)),              # w2^T chunk
            pl.BlockSpec((3, Dp_in), lambda i, k: (0, 0), **inv_kwargs),     # b2/g/beta
        ]
        out_specs = pl.BlockSpec((tm_eff, Dp_in), lambda i, k: (i, 0))
        scratch_shapes = [pltpu.VMEM((tm_eff, Dp_in), jnp.float32)]          # y acc
        dim_sem = ("parallel", "arbitrary")
        bytes_est = (
            4 * tm_eff * Dp_in * act_bytes
            + tm_eff * Dp_in * 4                      # f32 accumulator scratch
            + 2 * 2 * Dp_in * th_eff * 2              # w1/w2 chunks, double-buffered
            + 2 * 8 * th_eff * 4 + 8 * Dp_in * 4      # b1 chunks + LN params
            + tm_eff * th_eff * 6                     # h temporaries
            + tm_eff * Dp_in * 18                     # other temporaries
        )

    # Device-aware VMEM budget (never exceeds physical VMEM; leaves headroom).
    vmem_cap = dev_vmem - 4 * 1024 * 1024
    vmem_limit = int(min(max(2 * bytes_est, 32 * 1024 * 1024), vmem_cap))

    out2d = pl.pallas_call(
        kernel,
        out_shape=jax.ShapeDtypeStruct((M_pad, Dp_in), x.dtype),
        grid_spec=pltpu.PrefetchScalarGridSpec(
            num_scalar_prefetch=0,
            grid=grid,
            in_specs=in_specs,
            out_specs=out_specs,
            scratch_shapes=scratch_shapes,
        ),
        compiler_params=pltpu.CompilerParams(
            dimension_semantics=dim_sem,
            vmem_limit_bytes=vmem_limit),
    )(x2d, w1_t, b1_r, w2_t, lnp)

    if needs_pad:
        out2d = out2d[:M, :d_in]
    return out2d.reshape(B, L, d_in)


def positionwise_feed_forward(x, w1, b1, w2, b2, gamma, beta, *,
                              tm=512, th=512, force_stream=False):
    """Convenience entry (prep + call). For repeated inference calls, call
    prepare_ffn_params once and reuse ffn_forward directly."""
    w1_t, b1_r, w2_t, lnp, d_in, _ = prepare_ffn_params(w1, b1, w2, b2, gamma, beta)
    try:
        return ffn_forward(x, w1_t, b1_r, w2_t, lnp, d_in=d_in, tm=tm, th=th,
                           force_stream=force_stream,
                           single_buffer_invariants=True)
    except Exception:
        # Fallback if this toolchain's pallas_call pipeline rejects
        # pl.Buffered(1); default double-buffered invariants are still correct.
        return ffn_forward(x, w1_t, b1_r, w2_t, lnp, d_in=d_in, tm=tm, th=th,
                           force_stream=force_stream,
                           single_buffer_invariants=False)


def reference(x, w1, b1, w2, b2, gamma, beta):
    """Pure-JAX reference mirroring the PyTorch forward (eval mode) with the
    same bf16 matmul operands / f32 accumulation the kernel uses.
    (Parity with f32 PyTorch Conv1d is up to bf16 operand rounding.)"""
    xf = x.astype(jnp.float32)
    h = jnp.einsum("bld,hd->blh", xf.astype(jnp.bfloat16),
                   w1.astype(jnp.bfloat16),
                   preferred_element_type=jnp.float32) + b1
    h = jnp.maximum(h, 0.0)
    y = jnp.einsum("blh,dh->bld", h.astype(jnp.bfloat16),
                   w2.astype(jnp.bfloat16),
                   preferred_element_type=jnp.float32) + b2
    z = y + xf
    mu = jnp.mean(z, axis=-1, keepdims=True)
    var = jnp.mean((z - mu) ** 2, axis=-1, keepdims=True)
    return ((z - mu) / jnp.sqrt(var + LN_EPS)) * gamma + beta


if __name__ == "__main__":
    key = jax.random.PRNGKey(0)
    kx, k1, kb1, k2, kb2, kx2, k3, kb3, k4, kb4 = jax.random.split(key, 10)

    # --- small default shapes (resident-weight fast path) ---
    B, L, d_in, d_hid = 2, 8, 32, 64
    x = jax.random.normal(kx, (B, L, d_in), dtype=jnp.float32)
    # Conv1d(k=1) weights: (out_channels, in_channels).
    w1 = jax.random.normal(k1, (d_hid, d_in), dtype=jnp.float32) * 0.1
    b1 = jax.random.normal(kb1, (d_hid,), dtype=jnp.float32) * 0.1
    w2 = jax.random.normal(k2, (d_in, d_hid), dtype=jnp.float32) * 0.1
    b2 = jax.random.normal(kb2, (d_in,), dtype=jnp.float32) * 0.1
    gamma = jnp.ones((d_in,), dtype=jnp.float32)
    beta = jnp.zeros((d_in,), dtype=jnp.float32)

    out = jax.block_until_ready(
        positionwise_feed_forward(x, w1, b1, w2, b2, gamma, beta))
    ref = reference(x, w1, b1, w2, b2, gamma, beta)
    assert out.shape == (B, L, d_in)
    assert jnp.allclose(out, ref, atol=1e-3, rtol=1e-3), "resident path mismatch"

    # --- exercise the hidden-dim streaming (v7x) path explicitly ---
    B2, L2, d_in2, d_hid2 = 2, 16, 64, 256
    x2 = jax.random.normal(kx2, (B2, L2, d_in2), dtype=jnp.float32)
    w3 = jax.random.normal(k3, (d_hid2, d_in2), dtype=jnp.float32) * 0.1
    b3 = jax.random.normal(kb3, (d_hid2,), dtype=jnp.float32) * 0.1
    w4 = jax.random.normal(k4, (d_in2, d_hid2), dtype=jnp.float32) * 0.1
    b4 = jax.random.normal(kb4, (d_in2,), dtype=jnp.float32) * 0.1
    gamma2 = jnp.ones((d_in2,), dtype=jnp.float32) * 1.1
    beta2 = jnp.ones((d_in2,), dtype=jnp.float32) * 0.05

    out2 = jax.block_until_ready(
        positionwise_feed_forward(x2, w3, b3, w4, b4, gamma2, beta2,
                                  th=128, force_stream=True))
    ref2 = reference(x2, w3, b3, w4, b4, gamma2, beta2)
    assert out2.shape == (B2, L2, d_in2)
    assert jnp.allclose(out2, ref2, atol=1e-3, rtol=1e-3), "streaming path mismatch"

    print("KERNEL_OK")
</pallas_src>

<mosaic_0001>
module attributes {stable_mosaic.version = 11 : i64} {
  func.func @ffn_resident_kernel(%arg0: i32, %arg1: memref<16x128xf32, #tpu.memory_space<vmem>>, %arg2: memref<128x128xbf16, #tpu.memory_space<vmem>>, %arg3: memref<1x128xf32, #tpu.memory_space<vmem>>, %arg4: memref<128x128xbf16, #tpu.memory_space<vmem>>, %arg5: memref<3x128xf32, #tpu.memory_space<vmem>>, %arg6: memref<16x128xf32, #tpu.memory_space<vmem>>) attributes {dimension_semantics = [#tpu.dimension_semantics<parallel>], iteration_bounds = array<i64: 1>, scalar_prefetch = 0 : i64, scratch_operands = 0 : i64, tpu.core_type = #tpu.core_type<tc>, window_params = [{transform_indices = @transform_0, window_bounds = array<i64: 16, 128>}, {pipeline_mode = #tpu.pipeline_mode<synchronous>, transform_indices = @transform_1, window_bounds = array<i64: 128, 128>}, {pipeline_mode = #tpu.pipeline_mode<synchronous>, transform_indices = @transform_2, window_bounds = array<i64: 1, 128>}, {pipeline_mode = #tpu.pipeline_mode<synchronous>, transform_indices = @transform_3, window_bounds = array<i64: 128, 128>}, {pipeline_mode = #tpu.pipeline_mode<synchronous>, transform_indices = @transform_4, window_bounds = array<i64: 3, 128>}, {transform_indices = @transform_5, window_bounds = array<i64: 16, 128>}]} {
    %c0 = arith.constant 0 : index
    %c0_0 = arith.constant 0 : index
    %0 = vector.load %arg1[%c0, %c0_0] : memref<16x128xf32, #tpu.memory_space<vmem>>, vector<16x128xf32>
    %1 = arith.truncf %0 : vector<16x128xf32> to vector<16x128xbf16>
    %c0_1 = arith.constant 0 : index
    %c0_2 = arith.constant 0 : index
    %2 = vector.load %arg2[%c0_1, %c0_2] : memref<128x128xbf16, #tpu.memory_space<vmem>>, vector<128x128xbf16>
    %cst = arith.constant dense<0.000000e+00> : vector<16x128xf32>
    %3 = tpu.matmul %1, %2, %cst {dimension_numbers = #tpu.dot_dimension_numbers<[1], [0], [0], [1], [0, 0, 1, 1], [], []>} : vector<16x128xbf16>, vector<128x128xbf16>, vector<16x128xf32> -> vector<16x128xf32>
    %c0_3 = arith.constant 0 : index
    %c0_4 = arith.constant 0 : index
    %4 = vector.load %arg3[%c0_3, %c0_4] : memref<1x128xf32, #tpu.memory_space<vmem>>, vector<1x128xf32>
    %5 = vector.broadcast %4 : vector<1x128xf32> to vector<16x128xf32>
    %6 = arith.addf %3, %5 : vector<16x128xf32>
    %cst_5 = arith.constant 0.000000e+00 : f32
    %7 = vector.broadcast %cst_5 : f32 to vector<16x128xf32>
    %8 = arith.maximumf %6, %7 : vector<16x128xf32>
    %9 = arith.truncf %8 : vector<16x128xf32> to vector<16x128xbf16>
    %c0_6 = arith.constant 0 : index
    %c0_7 = arith.constant 0 : index
    %10 = vector.load %arg4[%c0_6, %c0_7] : memref<128x128xbf16, #tpu.memory_space<vmem>>, vector<128x128xbf16>
    %cst_8 = arith.constant dense<0.000000e+00> : vector<16x128xf32>
    %11 = tpu.matmul %9, %10, %cst_8 {dimension_numbers = #tpu.dot_dimension_numbers<[1], [0], [0], [1], [0, 0, 1, 1], [], []>} : vector<16x128xbf16>, vector<128x128xbf16>, vector<16x128xf32> -> vector<16x128xf32>
    %c0_9 = arith.constant 0 : index
    %c0_10 = arith.constant 0 : index
    %12 = vector.load %arg5[%c0_9, %c0_10] : memref<3x128xf32, #tpu.memory_space<vmem>>, vector<3x128xf32>
    %13 = vector.extract_strided_slice %12 {offsets = [0, 0], sizes = [1, 128], strides = [1, 1]} : vector<3x128xf32> to vector<1x128xf32>
    %14 = vector.broadcast %13 : vector<1x128xf32> to vector<16x128xf32>
    %15 = arith.addf %11, %14 : vector<16x128xf32>
    %16 = arith.addf %15, %0 : vector<16x128xf32>
    %17 = vector.extract_strided_slice %12 {offsets = [1, 0], sizes = [1, 128], strides = [1, 1]} : vector<3x128xf32> to vector<1x128xf32>
    %18 = vector.extract_strided_slice %12 {offsets = [2, 0], sizes = [1, 128], strides = [1, 1]} : vector<3x128xf32> to vector<1x128xf32>
    %cst_11 = arith.constant dense<0.000000e+00> : vector<16xf32>
    %19 = vector.multi_reduction <add>, %16, %cst_11 [1] : vector<16x128xf32> to vector<16xf32>
    %20 = vector.shape_cast %19 : vector<16xf32> to vector<16x1xf32>
    %cst_12 = arith.constant 3.125000e-02 : f32
    %21 = vector.broadcast %cst_12 : f32 to vector<16x1xf32>
    %22 = arith.mulf %20, %21 : vector<16x1xf32>
    %23 = vector.broadcast %22 : vector<16x1xf32> to vector<16x128xf32>
    %24 = arith.subf %16, %23 : vector<16x128xf32>
    %25 = arith.mulf %24, %24 : vector<16x128xf32>
    %cst_13 = arith.constant dense<0.000000e+00> : vector<16xf32>
    %26 = vector.multi_reduction <add>, %25, %cst_13 [1] : vector<16x128xf32> to vector<16xf32>
    %27 = vector.shape_cast %26 : vector<16xf32> to vector<16x1xf32>
    %28 = arith.mulf %22, %22 : vector<16x1xf32>
    %cst_14 = arith.constant 9.600000e+01 : f32
    %29 = vector.broadcast %cst_14 : f32 to vector<16x1xf32>
    %30 = arith.mulf %29, %28 : vector<16x1xf32>
    %31 = arith.subf %27, %30 : vector<16x1xf32>
    %cst_15 = arith.constant 3.125000e-02 : f32
    %32 = vector.broadcast %cst_15 : f32 to vector<16x1xf32>
    %33 = arith.mulf %31, %32 : vector<16x1xf32>
    %cst_16 = arith.constant 0.000000e+00 : f32
    %34 = vector.broadcast %cst_16 : f32 to vector<16x1xf32>
    %35 = arith.maximumf %33, %34 : vector<16x1xf32>
    %cst_17 = arith.constant 9.99999974E-6 : f32
    %36 = vector.broadcast %cst_17 : f32 to vector<16x1xf32>
    %37 = arith.addf %35, %36 : vector<16x1xf32>
    %38 = math.rsqrt %37 : vector<16x1xf32>
    %39 = vector.broadcast %38 : vector<16x1xf32> to vector<16x128xf32>
    %40 = arith.mulf %24, %39 : vector<16x128xf32>
    %41 = vector.broadcast %17 : vector<1x128xf32> to vector<16x128xf32>
    %42 = arith.mulf %40, %41 : vector<16x128xf32>
    %43 = vector.broadcast %18 : vector<1x128xf32> to vector<16x128xf32>
    %44 = arith.addf %42, %43 : vector<16x128xf32>
    %c0_18 = arith.constant 0 : index
    %c0_19 = arith.constant 0 : index
    %45 = vector.load %arg6[%c0_18, %c0_19] : memref<16x128xf32, #tpu.memory_space<vmem>>, vector<16x128xf32>
    tpu.vector_store %arg6[%c0_18, %c0_19], %44 {strides = array<i32>} : memref<16x128xf32, #tpu.memory_space<vmem>>, vector<16x128xf32>,
    return
  }
  func.func @transform_0(%arg0: i32) -> (i32, i32) {
    %c0_i32 = arith.constant 0 : i32
    %c0_i32_0 = arith.constant 0 : i32
    return %arg0, %c0_i32 : i32, i32
  }
  func.func @transform_1(%arg0: i32) -> (i32, i32) {
    %c0_i32 = arith.constant 0 : i32
    %c0_i32_0 = arith.constant 0 : i32
    %c0_i32_1 = arith.constant 0 : i32
    return %c0_i32, %c0_i32_0 : i32, i32
  }
  func.func @transform_2(%arg0: i32) -> (i32, i32) {
    %c0_i32 = arith.constant 0 : i32
    %c0_i32_0 = arith.constant 0 : i32
    %c0_i32_1 = arith.constant 0 : i32
    return %c0_i32, %c0_i32_0 : i32, i32
  }
  func.func @transform_3(%arg0: i32) -> (i32, i32) {
    %c0_i32 = arith.constant 0 : i32
    %c0_i32_0 = arith.constant 0 : i32
    %c0_i32_1 = arith.constant 0 : i32
    return %c0_i32, %c0_i32_0 : i32, i32
  }
  func.func @transform_4(%arg0: i32) -> (i32, i32) {
    %c0_i32 = arith.constant 0 : i32
    %c0_i32_0 = arith.constant 0 : i32
    %c0_i32_1 = arith.constant 0 : i32
    return %c0_i32, %c0_i32_0 : i32, i32
  }
  func.func @transform_5(%arg0: i32) -> (i32, i32) {
    %c0_i32 = arith.constant 0 : i32
    %c0_i32_0 = arith.constant 0 : i32
    return %arg0, %c0_i32 : i32, i32
  }
}

module attributes {stable_mosaic.version = 11 : i64} {
  func.func @ffn_resident_kernel(%arg0: i32, %arg1: memref<16x128xf32, #tpu.memory_space<vmem>>, %arg2: memref<128x128xbf16, #tpu.memory_space<vmem>>, %arg3: memref<1x128xf32, #tpu.memory_space<vmem>>, %arg4: memref<128x128xbf16, #tpu.memory_space<vmem>>, %arg5: memref<3x128xf32, #tpu.memory_space<vmem>>, %arg6: memref<16x128xf32, #tpu.memory_space<vmem>>) attributes {dimension_semantics = [#tpu.dimension_semantics<parallel>], iteration_bounds = array<i64: 1>, scalar_prefetch = 0 : i64, scratch_operands = 0 : i64, tpu.core_type = #tpu.core_type<tc>, window_params = [{transform_indices = @transform_0, window_bounds = array<i64: 16, 128>}, {pipeline_mode = #tpu.pipeline_mode<synchronous>, transform_indices = @transform_1, window_bounds = array<i64: 128, 128>}, {pipeline_mode = #tpu.pipeline_mode<synchronous>, transform_indices = @transform_2, window_bounds = array<i64: 1, 128>}, {pipeline_mode = #tpu.pipeline_mode<synchronous>, transform_indices = @transform_3, window_bounds = array<i64: 128, 128>}, {pipeline_mode = #tpu.pipeline_mode<synchronous>, transform_indices = @transform_4, window_bounds = array<i64: 3, 128>}, {transform_indices = @transform_5, window_bounds = array<i64: 16, 128>}]} {
    %c0 = arith.constant 0 : index
    %c0_0 = arith.constant 0 : index
    %0 = vector.load %arg1[%c0, %c0_0] : memref<16x128xf32, #tpu.memory_space<vmem>>, vector<16x128xf32>
    %1 = arith.truncf %0 : vector<16x128xf32> to vector<16x128xbf16>
    %c0_1 = arith.constant 0 : index
    %c0_2 = arith.constant 0 : index
    %2 = vector.load %arg2[%c0_1, %c0_2] : memref<128x128xbf16, #tpu.memory_space<vmem>>, vector<128x128xbf16>
    %cst = arith.constant dense<0.000000e+00> : vector<16x128xf32>
    %3 = tpu.matmul %1, %2, %cst {dimension_numbers = #tpu.dot_dimension_numbers<[1], [0], [0], [1], [0, 0, 1, 1], [], []>} : vector<16x128xbf16>, vector<128x128xbf16>, vector<16x128xf32> -> vector<16x128xf32>
    %c0_3 = arith.constant 0 : index
    %c0_4 = arith.constant 0 : index
    %4 = vector.load %arg3[%c0_3, %c0_4] : memref<1x128xf32, #tpu.memory_space<vmem>>, vector<1x128xf32>
    %5 = vector.broadcast %4 : vector<1x128xf32> to vector<16x128xf32>
    %6 = arith.addf %3, %5 : vector<16x128xf32>
    %cst_5 = arith.constant 0.000000e+00 : f32
    %7 = vector.broadcast %cst_5 : f32 to vector<16x128xf32>
    %8 = arith.maximumf %6, %7 : vector<16x128xf32>
    %9 = arith.truncf %8 : vector<16x128xf32> to vector<16x128xbf16>
    %c0_6 = arith.constant 0 : index
    %c0_7 = arith.constant 0 : index
    %10 = vector.load %arg4[%c0_6, %c0_7] : memref<128x128xbf16, #tpu.memory_space<vmem>>, vector<128x128xbf16>
    %cst_8 = arith.constant dense<0.000000e+00> : vector<16x128xf32>
    %11 = tpu.matmul %9, %10, %cst_8 {dimension_numbers = #tpu.dot_dimension_numbers<[1], [0], [0], [1], [0, 0, 1, 1], [], []>} : vector<16x128xbf16>, vector<128x128xbf16>, vector<16x128xf32> -> vector<16x128xf32>
    %c0_9 = arith.constant 0 : index
    %c0_10 = arith.constant 0 : index
    %12 = vector.load %arg5[%c0_9, %c0_10] : memref<3x128xf32, #tpu.memory_space<vmem>>, vector<3x128xf32>
    %13 = vector.extract_strided_slice %12 {offsets = [0, 0], sizes = [1, 128], strides = [1, 1]} : vector<3x128xf32> to vector<1x128xf32>
    %14 = vector.broadcast %13 : vector<1x128xf32> to vector<16x128xf32>
    %15 = arith.addf %11, %14 : vector<16x128xf32>
    %16 = arith.addf %15, %0 : vector<16x128xf32>
    %17 = vector.extract_strided_slice %12 {offsets = [1, 0], sizes = [1, 128], strides = [1, 1]} : vector<3x128xf32> to vector<1x128xf32>
    %18 = vector.extract_strided_slice %12 {offsets = [2, 0], sizes = [1, 128], strides = [1, 1]} : vector<3x128xf32> to vector<1x128xf32>
    %cst_11 = arith.constant dense<0.000000e+00> : vector<16xf32>
    %19 = vector.multi_reduction <add>, %16, %cst_11 [1] : vector<16x128xf32> to vector<16xf32>
    %20 = vector.shape_cast %19 : vector<16xf32> to vector<16x1xf32>
    %cst_12 = arith.constant 3.125000e-02 : f32
    %21 = vector.broadcast %cst_12 : f32 to vector<16x1xf32>
    %22 = arith.mulf %20, %21 : vector<16x1xf32>
    %23 = vector.broadcast %22 : vector<16x1xf32> to vector<16x128xf32>
    %24 = arith.subf %16, %23 : vector<16x128xf32>
    %25 = arith.mulf %24, %24 : vector<16x128xf32>
    %cst_13 = arith.constant dense<0.000000e+00> : vector<16xf32>
    %26 = vector.multi_reduction <add>, %25, %cst_13 [1] : vector<16x128xf32> to vector<16xf32>
    %27 = vector.shape_cast %26 : vector<16xf32> to vector<16x1xf32>
    %28 = arith.mulf %22, %22 : vector<16x1xf32>
    %cst_14 = arith.constant 9.600000e+01 : f32
    %29 = vector.broadcast %cst_14 : f32 to vector<16x1xf32>
    %30 = arith.mulf %29, %28 : vector<16x1xf32>
    %31 = arith.subf %27, %30 : vector<16x1xf32>
    %cst_15 = arith.constant 3.125000e-02 : f32
    %32 = vector.broadcast %cst_15 : f32 to vector<16x1xf32>
    %33 = arith.mulf %31, %32 : vector<16x1xf32>
    %cst_16 = arith.constant 0.000000e+00 : f32
    %34 = vector.broadcast %cst_16 : f32 to vector<16x1xf32>
    %35 = arith.maximumf %33, %34 : vector<16x1xf32>
    %cst_17 = arith.constant 9.99999974E-6 : f32
    %36 = vector.broadcast %cst_17 : f32 to vector<16x1xf32>
    %37 = arith.addf %35, %36 : vector<16x1xf32>
    %38 = math.rsqrt %37 : vector<16x1xf32>
    %39 = vector.broadcast %38 : vector<16x1xf32> to vector<16x128xf32>
    %40 = arith.mulf %24, %39 : vector<16x128xf32>
    %41 = vector.broadcast %17 : vector<1x128xf32> to vector<16x128xf32>
    %42 = arith.mulf %40, %41 : vector<16x128xf32>
    %43 = vector.broadcast %18 : vector<1x128xf32> to vector<16x128xf32>
    %44 = arith.addf %42, %43 : vector<16x128xf32>
    %c0_18 = arith.constant 0 : index
    %c0_19 = arith.constant 0 : index
    %45 = vector.load %arg6[%c0_18, %c0_19] : memref<16x128xf32, #tpu.memory_space<vmem>>, vector<16x128xf32>
    tpu.vector_store %arg6[%c0_18, %c0_19], %44 {strides = array<i32>} : memref<16x128xf32, #tpu.memory_space<vmem>>, vector<16x128xf32>,
    return
  }
  func.func @transform_0(%arg0: i32) -> (i32, i32) {
    %c0_i32 = arith.constant 0 : i32
    %c0_i32_0 = arith.constant 0 : i32
    return %arg0, %c0_i32 : i32, i32
  }
  func.func @transform_1(%arg0: i32) -> (i32, i32) {
    %c0_i32 = arith.constant 0 : i32
    %c0_i32_0 = arith.constant 0 : i32
    %c0_i32_1 = arith.constant 0 : i32
    return %c0_i32, %c0_i32_0 : i32, i32
  }
  func.func @transform_2(%arg0: i32) -> (i32, i32) {
    %c0_i32 = arith.constant 0 : i32
    %c0_i32_0 = arith.constant 0 : i32
    %c0_i32_1 = arith.constant 0 : i32
    return %c0_i32, %c0_i32_0 : i32, i32
  }
  func.func @transform_3(%arg0: i32) -> (i32, i32) {
    %c0_i32 = arith.constant 0 : i32
    %c0_i32_0 = arith.constant 0 : i32
    %c0_i32_1 = arith.constant 0 : i32
    return %c0_i32, %c0_i32_0 : i32, i32
  }
  func.func @transform_4(%arg0: i32) -> (i32, i32) {
    %c0_i32 = arith.constant 0 : i32
    %c0_i32_0 = arith.constant 0 : i32
    %c0_i32_1 = arith.constant 0 : i32
    return %c0_i32, %c0_i32_0 : i32, i32
  }
  func.func @transform_5(%arg0: i32) -> (i32, i32) {
    %c0_i32 = arith.constant 0 : i32
    %c0_i32_0 = arith.constant 0 : i32
    return %arg0, %c0_i32 : i32, i32
  }
}

</mosaic_0001>

<llo_original>
// kernel: ffn_forward.1
$region0: #{ffn_forward.1}
  #allocation0 [shape = 'u32[]', space=smem, size = 0x4, offset = 0x4, fixed_abs, tag = 'smem constant byte address 0x4 - core index']
  #allocation1 [shape = 'u32[144,128]{1,0:T(1,128)}', space=vmem, size = 0x12000, scoped, tag = 'internal scratch']
  %s0 = inlined_call_operand.vmem [shape: f32[16,128], index: 0, kind: input, shape index: {}]
  %s1 = inlined_call_operand.hbm [shape: bf16[128,128], index: 1, kind: input, shape index: {}]
  %s2 = inlined_call_operand.vmem [shape: f32[1,128], index: 2, kind: input, shape index: {}]
  %s3 = inlined_call_operand.hbm [shape: bf16[128,128], index: 3, kind: input, shape index: {}]
  %s4 = inlined_call_operand.vmem [shape: f32[3,128], index: 4, kind: input, shape index: {}]
  %s5 = inlined_call_operand.vmem [shape: f32[16,128], index: 5, kind: output, shape index: {}]
  %s6 = sld [smem:[#allocation0]]
  $region38: #{ffn_forward.1} parent=0
    _
  %s8 = ssub.s32 1, %s6
  %s9 = scalar_select 0, %s8, %s6
  $region1: #{ffn_forward.1} parent=0
    #allocation2 [shape = 'u8[32768]{0}', space=vmem, size = 0x8000, scoped, tag = 'input window, operand 1, single buffered']
    #allocation3 [shape = 's32[1]{0}', space=sflag, size = 0x4, scoped, tag = 'scoped memory for ffn_forward.1']
    #allocation4 [shape = 'u8[32768]{0}', space=vmem, size = 0x8000, scoped, tag = 'input window, operand 3, single buffered']
    #allocation5 [shape = 's32[1]{0}', space=sflag, size = 0x4, scoped, tag = 'scoped memory for ffn_forward.1']
    %10 = vsyncpa [#allocation3], 0
    %11 = vsyncpa [#allocation5], 0
    // Predicated region
    $region2: #{ffn_forward.1} parent=1 // pred_check
      _
    $region3: #{ffn_forward.1} parent=1 // pred_check_branch
      %13 = sbr.rel (0) target = $region5
    $region4: #{ffn_forward.1} parent=1 // pred_region
      _
    $region5: #{ffn_forward.1} parent=1 // pred_fallthru
      _
    // Predicated region
    $region6: #{ffn_forward.1} parent=1 // pred_check
      _
    $region7: #{ffn_forward.1} parent=1 // pred_check_branch
      %15 = sbr.rel (0) target = $region9
    $region8: #{ffn_forward.1} parent=1 // pred_region
      %s17 = ssub.s32 1024, 1024
      %18 = vsyncadd [#allocation3], %s17
      %s19 = sshll.u32 [#allocation2], 4
      %s20 = int_to_ptr.vmem [resolvable:$true] %s19
      %25 = dma.hbm_to_vmem [thread:$0]  %s1, 1024, %s20, [#allocation3], 64, 64, 4
    $region9: #{ffn_forward.1} parent=1 // pred_fallthru
      _
    // Predicated region
    $region10: #{ffn_forward.1} parent=1 // pred_check
      _
    $region11: #{ffn_forward.1} parent=1 // pred_check_branch
      %27 = sbr.rel (0) target = $region13
    $region12: #{ffn_forward.1} parent=1 // pred_region
      _
    $region13: #{ffn_forward.1} parent=1 // pred_fallthru
      _
    // Predicated region
    $region14: #{ffn_forward.1} parent=1 // pred_check
      _
    $region15: #{ffn_forward.1} parent=1 // pred_check_branch
      %29 = sbr.rel (0) target = $region17
    $region16: #{ffn_forward.1} parent=1 // pred_region
      %s31 = ssub.s32 1024, 1024
      %32 = vsyncadd [#allocation5], %s31
      %s33 = sshll.u32 [#allocation4], 4
      %s34 = int_to_ptr.vmem [resolvable:$true] %s33
      %39 = dma.hbm_to_vmem [thread:$0]  %s3, 1024, %s34, [#allocation5], 64, 64, 4
    $region17: #{ffn_forward.1} parent=1 // pred_fallthru
      _
    // Predicated region
    $region18: #{ffn_forward.1} parent=1 // pred_check
      _
    $region19: #{ffn_forward.1} parent=1 // pred_check_branch
      %41 = sbr.rel (0) target = $region21
    $region20: #{ffn_forward.1} parent=1 // pred_region
      _
    $region21: #{ffn_forward.1} parent=1 // pred_fallthru
      _
    // Predicated region
    $region22: #{ffn_forward.1} parent=1 // pred_check
      _
    $region23: #{ffn_forward.1} parent=1 // pred_check_branch
      %43 = sbr.rel (0) target = $region25
    $region24: #{ffn_forward.1} parent=1 // pred_region
      %44 = dma.done [#allocation3], 1024
    $region25: #{ffn_forward.1} parent=1 // pred_fallthru
      _
    // Predicated region
    $region26: #{ffn_forward.1} parent=1 // pred_check
      _
    $region27: #{ffn_forward.1} parent=1 // pred_check_branch
      %46 = sbr.rel (0) target = $region29
    $region28: #{ffn_forward.1} parent=1 // pred_region
      %47 = dma.done [#allocation5], 1024
    $region29: #{ffn_forward.1} parent=1 // pred_fallthru
      _
    %v49 = vld [vmem:[%s0] sm:$0xff]
    %v50 = vld [vmem:[%s0 + $0x8] sm:$0xff]
    %v51 = vpack.c.bf16 %v50, %v49
    %v52 = vld [vmem:[#allocation2] sm:$0xf]
    %v53 = vld [vmem:[#allocation2 + $0x4] sm:$0xf]
    %v54 = vld [vmem:[#allocation2 + $0x8] sm:$0xf]
    %v55 = vld [vmem:[#allocation2 + $0xc] sm:$0xf]
    %v56 = vld [vmem:[#allocation2 + $0x10] sm:$0xf]
    %v57 = vld [vmem:[#allocation2 + $0x14] sm:$0xf]
    %v58 = vld [vmem:[#allocation2 + $0x18] sm:$0xf]
    %v59 = vld [vmem:[#allocation2 + $0x1c] sm:$0xf]
    %v60 = vld [vmem:[#allocation2 + $0x20] sm:$0xf]
    %v61 = vld [vmem:[#allocation2 + $0x24] sm:$0xf]
    %v62 = vld [vmem:[#allocation2 + $0x28] sm:$0xf]
    %v63 = vld [vmem:[#allocation2 + $0x2c] sm:$0xf]
    %v64 = vld [vmem:[#allocation2 + $0x30] sm:$0xf]
    %v65 = vld [vmem:[#allocation2 + $0x34] sm:$0xf]
    %v66 = vld [vmem:[#allocation2 + $0x38] sm:$0xf]
    %v67 = vld [vmem:[#allocation2 + $0x3c] sm:$0xf]
    %v68 = vld [vmem:[%s2] sm:$0x1]
    %v70 = vlaneseq
    %v71 = vshrl.u32 %v70, 7
    %v72 = vsub.s32 0, %v71
    %v73 = vrot.slane %v68, %v72
    %v91 = vunpack.c.l.b16 %v52
    %v92 = vunpack.c.l.b16 %v53
    %v93 = vunpack.c.l.b16 %v54
    %v94 = vunpack.c.l.b16 %v55
    %v95 = vunpack.c.l.b16 %v56
    %v96 = vunpack.c.l.b16 %v57
    %v97 = vunpack.c.l.b16 %v58
    %v98 = vunpack.c.l.b16 %v59
    %v99 = vunpack.c.l.b16 %v60
    %v100 = vunpack.c.l.b16 %v61
    %v101 = vunpack.c.l.b16 %v62
    %v102 = vunpack.c.l.b16 %v63
    %v103 = vunpack.c.l.b16 %v64
    %v104 = vunpack.c.l.b16 %v65
    %v105 = vunpack.c.l.b16 %v66
    %v106 = vunpack.c.l.b16 %v67
    %v107 = vpack.c.b16 %v92, %v91
    %v108 = vpack.c.b16 %v94, %v93
    %v109 = vpack.c.b16 %v96, %v95
    %v110 = vpack.c.b16 %v98, %v97
    %v111 = vpack.c.b16 %v100, %v99
    %v112 = vpack.c.b16 %v102, %v101
    %v113 = vpack.c.b16 %v104, %v103
    %v114 = vpack.c.b16 %v106, %v105
    %123 = vmatprep.subr.bf16.mxu0 0
    %124 = vmatpush1.bf16.msra.mxu0 %v107
    %125 = vmatprep.subr.bf16.mxu0 0
    %126 = vmatpush1.bf16.msra.mxu0 %v108
    %127 = vmatprep.subr.bf16.mxu0 0
    %128 = vmatpush1.bf16.msra.mxu0 %v109
    %129 = vmatprep.subr.bf16.mxu0 0
    %130 = vmatpush1.bf16.msra.mxu0 %v110
    %131 = vmatprep.subr.bf16.mxu0 0
    %132 = vmatpush1.bf16.msra.mxu0 %v111
    %133 = vmatprep.subr.bf16.mxu0 0
    %134 = vmatpush1.bf16.msra.mxu0 %v112
    %135 = vmatprep.subr.bf16.mxu0 0
    %136 = vmatpush1.bf16.msra.mxu0 %v113
    %137 = vmatprep.subr.bf16.mxu0 0
    %138 = vmatpush1.bf16.msra.mxu0 %v114
    %139 = vmatprep.subr.bf16.mxu0 0
    %140 = vmatpush1.bf16.msra.mxu0 0
    %141 = vmatprep.subr.bf16.mxu0 0
    %142 = vmatpush1.bf16.msra.mxu0 0
    %143 = vmatprep.subr.bf16.mxu0 0
    %144 = vmatpush1.bf16.msra.mxu0 0
    %145 = vmatprep.subr.bf16.mxu0 0
    %146 = vmatpush1.bf16.msra.mxu0 0
    %147 = vmatprep.subr.bf16.mxu0 0
    %148 = vmatpush1.bf16.msra.mxu0 0
    %149 = vmatprep.subr.bf16.mxu0 0
    %150 = vmatpush1.bf16.msra.mxu0 0
    %151 = vmatprep.subr.bf16.mxu0 0
    %152 = vmatpush1.bf16.msra.mxu0 0
    %153 = vmatprep.subr.bf16.mxu0 0
    %154 = vmatpush1.bf16.msra.mxu0 0
    %155 = vmatprep.mubr.bf16.mxu0 0
    %156 = vmatmul.mubr.bf16.gmra.mrb[0].mxu0 %v51
    %v157 = vpop.f32.mrb[0].mxu0
    %v158 = vadd.f32 %v73, %v157
    %v159 = vpop.f32.mrb[0].mxu0
    %v160 = vpop.f32.mrb[0].mxu0
    %v161 = vadd.f32 %v73, %v160
    %v162 = vpop.f32.mrb[0].mxu0
    %163 = vdwg.mxu0
    %v164 = vmax.f32 %v158, 0.0
    %v165 = vmax.f32 %v161, 0.0
    %v166 = vpack.c.bf16 %v165, %v164
    %v167 = vld [vmem:[#allocation4] sm:$0xf]
    %v168 = vld [vmem:[#allocation4 + $0x4] sm:$0xf]
    %v169 = vld [vmem:[#allocation4 + $0x8] sm:$0xf]
    %v170 = vld [vmem:[#allocation4 + $0xc] sm:$0xf]
    %v171 = vld [vmem:[#allocation4 + $0x10] sm:$0xf]
    %v172 = vld [vmem:[#allocation4 + $0x14] sm:$0xf]
    %v173 = vld [vmem:[#allocation4 + $0x18] sm:$0xf]
    %v174 = vld [vmem:[#allocation4 + $0x1c] sm:$0xf]
    %v175 = vld [vmem:[#allocation4 + $0x20] sm:$0xf]
    %v176 = vld [vmem:[#allocation4 + $0x24] sm:$0xf]
    %v177 = vld [vmem:[#allocation4 + $0x28] sm:$0xf]
    %v178 = vld [vmem:[#allocation4 + $0x2c] sm:$0xf]
    %v179 = vld [vmem:[#allocation4 + $0x30] sm:$0xf]
    %v180 = vld [vmem:[#allocation4 + $0x34] sm:$0xf]
    %v181 = vld [vmem:[#allocation4 + $0x38] sm:$0xf]
    %v182 = vld [vmem:[#allocation4 + $0x3c] sm:$0xf]
    %v183 = vld [vmem:[%s4] sm:$0x7]
    %v184 = vlaneseq
    %v185 = vshrl.u32 %v184, 7
    %v186 = vsub.s32 0, %v185
    %v187 = vrot.slane %v183, %v186
    %v204 = vunpack.c.l.b16 %v167
    %v205 = vunpack.c.l.b16 %v168
    %v206 = vunpack.c.l.b16 %v169
    %v207 = vunpack.c.l.b16 %v170
    %v208 = vunpack.c.l.b16 %v171
    %v209 = vunpack.c.l.b16 %v172
    %v210 = vunpack.c.l.b16 %v173
    %v211 = vunpack.c.l.b16 %v174
    %v212 = vunpack.c.l.b16 %v175
    %v213 = vunpack.c.l.b16 %v176
    %v214 = vunpack.c.l.b16 %v177
    %v215 = vunpack.c.l.b16 %v178
    %v216 = vunpack.c.l.b16 %v179
    %v217 = vunpack.c.l.b16 %v180
    %v218 = vunpack.c.l.b16 %v181
    %v219 = vunpack.c.l.b16 %v182
    %v220 = vpack.c.b16 %v205, %v204
    %v221 = vpack.c.b16 %v207, %v206
    %v222 = vpack.c.b16 %v209, %v208
    %v223 = vpack.c.b16 %v211, %v210
    %v224 = vpack.c.b16 %v213, %v212
    %v225 = vpack.c.b16 %v215, %v214
    %v226 = vpack.c.b16 %v217, %v216
    %v227 = vpack.c.b16 %v219, %v218
    %236 = vmatprep.subr.bf16.mxu0 0
    %237 = vmatpush1.bf16.msra.mxu0 %v220
    %238 = vmatprep.subr.bf16.mxu0 0
    %239 = vmatpush1.bf16.msra.mxu0 %v221
    %240 = vmatprep.subr.bf16.mxu0 0
    %241 = vmatpush1.bf16.msra.mxu0 %v222
    %242 = vmatprep.subr.bf16.mxu0 0
    %243 = vmatpush1.bf16.msra.mxu0 %v223
    %244 = vmatprep.subr.bf16.mxu0 0
    %245 = vmatpush1.bf16.msra.mxu0 %v224
    %246 = vmatprep.subr.bf16.mxu0 0
    %247 = vmatpush1.bf16.msra.mxu0 %v225
    %248 = vmatprep.subr.bf16.mxu0 0
    %249 = vmatpush1.bf16.msra.mxu0 %v226
    %250 = vmatprep.subr.bf16.mxu0 0
    %251 = vmatpush1.bf16.msra.mxu0 %v227
    %252 = vmatprep.subr.bf16.mxu0 0
    %253 = vmatpush1.bf16.msra.mxu0 0
    %254 = vmatprep.subr.bf16.mxu0 0
    %255 = vmatpush1.bf16.msra.mxu0 0
    %256 = vmatprep.subr.bf16.mxu0 0
    %257 = vmatpush1.bf16.msra.mxu0 0
    %258 = vmatprep.subr.bf16.mxu0 0
    %259 = vmatpush1.bf16.msra.mxu0 0
    %260 = vmatprep.subr.bf16.mxu0 0
    %261 = vmatpush1.bf16.msra.mxu0 0
    %262 = vmatprep.subr.bf16.mxu0 0
    %263 = vmatpush1.bf16.msra.mxu0 0
    %264 = vmatprep.subr.bf16.mxu0 0
    %265 = vmatpush1.bf16.msra.mxu0 0
    %266 = vmatprep.subr.bf16.mxu0 0
    %267 = vmatpush1.bf16.msra.mxu0 0
    %268 = vmatprep.mubr.bf16.mxu0 0
    %269 = vmatmul.mubr.bf16.gmra.mrb[0].mxu0 %v166
    %v270 = vpop.f32.mrb[0].mxu0
    %v271 = vadd.f32 %v187, %v270
    %v272 = vpop.f32.mrb[0].mxu0
    %v273 = vpop.f32.mrb[0].mxu0
    %v274 = vadd.f32 %v187, %v273
    %v275 = vpop.f32.mrb[0].mxu0
    %276 = vdwg.mxu0
    %v277 = vadd.f32 %v271, %v49
    %v278 = vadd.f32 %v274, %v50
    %279 = vadd.xlane.f32.xlu0 %v277
    %v280 = vpop.xlane.xlu0 %279
    %281 = vadd.xlane.f32.xlu0 %v278
    %v282 = vpop.xlane.xlu0 %281
    %v283 = vmul.f32 %v280, 0.03125
    %v284 = vmul.f32 %v282, 0.03125
    %v285 = vsub.f32 %v277, %v283
    %v286 = vsub.f32 %v278, %v284
    %v287 = vmul.f32 %v285, %v285
    %v288 = vmul.f32 %v286, %v286
    %289 = vadd.xlane.f32.xlu0 %v287
    %v290 = vpop.xlane.xlu0 %289
    %291 = vadd.xlane.f32.xlu0 %v288
    %v292 = vpop.xlane.xlu0 %291
    %v293 = vmul.f32 %v283, %v283
    %v294 = vmul.f32 %v284, %v284
    %v295 = vmul.f32 %v293, 96.0
    %v296 = vmul.f32 %v294, 96.0
    %v297 = vsub.f32 %v290, %v295
    %v298 = vsub.f32 %v292, %v296
    %v299 = vmul.f32 %v297, 0.03125
    %v300 = vmul.f32 %v298, 0.03125
    %v301 = vmax.f32 %v299, 0.0
    %v302 = vmax.f32 %v300, 0.0
    %v303 = vadd.f32 %v301, 1e-05
    %v304 = vadd.f32 %v302, 1e-05
    %v305 = vrsqrt.pop %v303
    %v306 = vrsqrt.pop %v304
    %v307 = vmul.f32 %v285, %v305
    %v308 = vmul.f32 %v286, %v306
    %v309 = vlaneseq
    %v310 = vshrl.u32 %v309, 7
    %v311 = vsub.s32 1, %v310
    %v312 = vrot.slane %v183, %v311
    %v313 = vmul.f32 %v307, %v312
    %v314 = vmul.f32 %v308, %v312
    %v315 = vlaneseq
    %v316 = vshrl.u32 %v315, 7
    %v317 = vsub.s32 2, %v316
    %v318 = vrot.slane %v183, %v317
    %v319 = vadd.f32 %v313, %v318
    %v320 = vadd.f32 %v314, %v318
    %321 = vst [vmem:[%s5] sm:$0xff] %v319
    %322 = vst [vmem:[%s5 + $0x8] sm:$0xff] %v320
    // Predicated region
    $region30: #{ffn_forward.1} parent=1 // pred_check
      _
    $region31: #{ffn_forward.1} parent=1 // pred_check_branch
      %324 = sbr.rel (0) target = $region33
    $region32: #{ffn_forward.1} parent=1 // pred_region
      _
    $region33: #{ffn_forward.1} parent=1 // pred_fallthru
      _
    // Predicated region
    $region34: #{ffn_forward.1} parent=1 // pred_check
      _
    $region35: #{ffn_forward.1} parent=1 // pred_check_branch
      %326 = sbr.rel (0) target = $region37
    $region36: #{ffn_forward.1} parent=1 // pred_region
      _
    $region37: #{ffn_forward.1} parent=1 // pred_fallthru
      _
    %327 = vsyncpa [#allocation3], 1
    %328 = vsyncpa [#allocation5], 1

// kernel: ffn_forward.1
$region0: #{ffn_forward.1}
  #allocation0 [shape = 'u32[]', space=smem, size = 0x4, offset = 0x4, fixed_abs, tag = 'smem constant byte address 0x4 - core index']
  #allocation1 [shape = 'u32[144,128]{1,0:T(1,128)}', space=vmem, size = 0x12000, scoped, tag = 'internal scratch']
  %s0 = inlined_call_operand.vmem [shape: f32[16,128], index: 0, kind: input, shape index: {}]
  %s1 = inlined_call_operand.hbm [shape: bf16[128,128], index: 1, kind: input, shape index: {}]
  %s2 = inlined_call_operand.vmem [shape: f32[1,128], index: 2, kind: input, shape index: {}]
  %s3 = inlined_call_operand.hbm [shape: bf16[128,128], index: 3, kind: input, shape index: {}]
  %s4 = inlined_call_operand.vmem [shape: f32[3,128], index: 4, kind: input, shape index: {}]
  %s5 = inlined_call_operand.vmem [shape: f32[16,128], index: 5, kind: output, shape index: {}]
  %s6 = sld [smem:[#allocation0]]
  $region38: #{ffn_forward.1} parent=0
    _
  %s8 = ssub.s32 1, %s6
  %s9 = scalar_select 0, %s8, %s6
  $region1: #{ffn_forward.1} parent=0
    #allocation2 [shape = 'u8[32768]{0}', space=vmem, size = 0x8000, scoped, tag = 'input window, operand 1, single buffered']
    #allocation3 [shape = 's32[1]{0}', space=sflag, size = 0x4, scoped, tag = 'scoped memory for ffn_forward.1']
    #allocation4 [shape = 'u8[32768]{0}', space=vmem, size = 0x8000, scoped, tag = 'input window, operand 3, single buffered']
    #allocation5 [shape = 's32[1]{0}', space=sflag, size = 0x4, scoped, tag = 'scoped memory for ffn_forward.1']
    %10 = vsyncpa [#allocation3], 0
    %11 = vsyncpa [#allocation5], 0
    // Predicated region
    $region2: #{ffn_forward.1} parent=1 // pred_check
      _
    $region3: #{ffn_forward.1} parent=1 // pred_check_branch
      %13 = sbr.rel (0) target = $region5
    $region4: #{ffn_forward.1} parent=1 // pred_region
      _
    $region5: #{ffn_forward.1} parent=1 // pred_fallthru
      _
    // Predicated region
    $region6: #{ffn_forward.1} parent=1 // pred_check
      _
    $region7: #{ffn_forward.1} parent=1 // pred_check_branch
      %15 = sbr.rel (0) target = $region9
    $region8: #{ffn_forward.1} parent=1 // pred_region
      %s17 = ssub.s32 1024, 1024
      %18 = vsyncadd [#allocation3], %s17
      %s19 = sshll.u32 [#allocation2], 4
      %s20 = int_to_ptr.vmem [resolvable:$true] %s19
      %25 = dma.hbm_to_vmem [thread:$0]  %s1, 1024, %s20, [#allocation3], 64, 64, 4
    $region9: #{ffn_forward.1} parent=1 // pred_fallthru
      _
    // Predicated region
    $region10: #{ffn_forward.1} parent=1 // pred_check
      _
    $region11: #{ffn_forward.1} parent=1 // pred_check_branch
      %27 = sbr.rel (0) target = $region13
    $region12: #{ffn_forward.1} parent=1 // pred_region
      _
    $region13: #{ffn_forward.1} parent=1 // pred_fallthru
      _
    // Predicated region
    $region14: #{ffn_forward.1} parent=1 // pred_check
      _
    $region15: #{ffn_forward.1} parent=1 // pred_check_branch
      %29 = sbr.rel (0) target = $region17
    $region16: #{ffn_forward.1} parent=1 // pred_region
      %s31 = ssub.s32 1024, 1024
      %32 = vsyncadd [#allocation5], %s31
      %s33 = sshll.u32 [#allocation4], 4
      %s34 = int_to_ptr.vmem [resolvable:$true] %s33
      %39 = dma.hbm_to_vmem [thread:$0]  %s3, 1024, %s34, [#allocation5], 64, 64, 4
    $region17: #{ffn_forward.1} parent=1 // pred_fallthru
      _
    // Predicated region
    $region18: #{ffn_forward.1} parent=1 // pred_check
      _
    $region19: #{ffn_forward.1} parent=1 // pred_check_branch
      %41 = sbr.rel (0) target = $region21
    $region20: #{ffn_forward.1} parent=1 // pred_region
      _
    $region21: #{ffn_forward.1} parent=1 // pred_fallthru
      _
    // Predicated region
    $region22: #{ffn_forward.1} parent=1 // pred_check
      _
    $region23: #{ffn_forward.1} parent=1 // pred_check_branch
      %43 = sbr.rel (0) target = $region25
    $region24: #{ffn_forward.1} parent=1 // pred_region
      %44 = dma.done [#allocation3], 1024
    $region25: #{ffn_forward.1} parent=1 // pred_fallthru
      _
    // Predicated region
    $region26: #{ffn_forward.1} parent=1 // pred_check
      _
    $region27: #{ffn_forward.1} parent=1 // pred_check_branch
      %46 = sbr.rel (0) target = $region29
    $region28: #{ffn_forward.1} parent=1 // pred_region
      %47 = dma.done [#allocation5], 1024
    $region29: #{ffn_forward.1} parent=1 // pred_fallthru
      _
    %v49 = vld [vmem:[%s0] sm:$0xff]
    %v50 = vld [vmem:[%s0 + $0x8] sm:$0xff]
    %v51 = vpack.c.bf16 %v50, %v49
    %v52 = vld [vmem:[#allocation2] sm:$0xf]
    %v53 = vld [vmem:[#allocation2 + $0x4] sm:$0xf]
    %v54 = vld [vmem:[#allocation2 + $0x8] sm:$0xf]
    %v55 = vld [vmem:[#allocation2 + $0xc] sm:$0xf]
    %v56 = vld [vmem:[#allocation2 + $0x10] sm:$0xf]
    %v57 = vld [vmem:[#allocation2 + $0x14] sm:$0xf]
    %v58 = vld [vmem:[#allocation2 + $0x18] sm:$0xf]
    %v59 = vld [vmem:[#allocation2 + $0x1c] sm:$0xf]
    %v60 = vld [vmem:[#allocation2 + $0x20] sm:$0xf]
    %v61 = vld [vmem:[#allocation2 + $0x24] sm:$0xf]
    %v62 = vld [vmem:[#allocation2 + $0x28] sm:$0xf]
    %v63 = vld [vmem:[#allocation2 + $0x2c] sm:$0xf]
    %v64 = vld [vmem:[#allocation2 + $0x30] sm:$0xf]
    %v65 = vld [vmem:[#allocation2 + $0x34] sm:$0xf]
    %v66 = vld [vmem:[#allocation2 + $0x38] sm:$0xf]
    %v67 = vld [vmem:[#allocation2 + $0x3c] sm:$0xf]
    %v68 = vld [vmem:[%s2] sm:$0x1]
    %v70 = vlaneseq
    %v71 = vshrl.u32 %v70, 7
    %v72 = vsub.s32 0, %v71
    %v73 = vrot.slane %v68, %v72
    %v91 = vunpack.c.l.b16 %v52
    %v92 = vunpack.c.l.b16 %v53
    %v93 = vunpack.c.l.b16 %v54
    %v94 = vunpack.c.l.b16 %v55
    %v95 = vunpack.c.l.b16 %v56
    %v96 = vunpack.c.l.b16 %v57
    %v97 = vunpack.c.l.b16 %v58
    %v98 = vunpack.c.l.b16 %v59
    %v99 = vunpack.c.l.b16 %v60
    %v100 = vunpack.c.l.b16 %v61
    %v101 = vunpack.c.l.b16 %v62
    %v102 = vunpack.c.l.b16 %v63
    %v103 = vunpack.c.l.b16 %v64
    %v104 = vunpack.c.l.b16 %v65
    %v105 = vunpack.c.l.b16 %v66
    %v106 = vunpack.c.l.b16 %v67
    %v107 = vpack.c.b16 %v92, %v91
    %v108 = vpack.c.b16 %v94, %v93
    %v109 = vpack.c.b16 %v96, %v95
    %v110 = vpack.c.b16 %v98, %v97
    %v111 = vpack.c.b16 %v100, %v99
    %v112 = vpack.c.b16 %v102, %v101
    %v113 = vpack.c.b16 %v104, %v103
    %v114 = vpack.c.b16 %v106, %v105
    %123 = vmatprep.subr.bf16.mxu0 0
    %124 = vmatpush1.bf16.msra.mxu0 %v107
    %125 = vmatprep.subr.bf16.mxu0 0
    %126 = vmatpush1.bf16.msra.mxu0 %v108
    %127 = vmatprep.subr.bf16.mxu0 0
    %128 = vmatpush1.bf16.msra.mxu0 %v109
    %129 = vmatprep.subr.bf16.mxu0 0
    %130 = vmatpush1.bf16.msra.mxu0 %v110
    %131 = vmatprep.subr.bf16.mxu0 0
    %132 = vmatpush1.bf16.msra.mxu0 %v111
    %133 = vmatprep.subr.bf16.mxu0 0
    %134 = vmatpush1.bf16.msra.mxu0 %v112
    %135 = vmatprep.subr.bf16.mxu0 0
    %136 = vmatpush1.bf16.msra.mxu0 %v113
    %137 = vmatprep.subr.bf16.mxu0 0
    %138 = vmatpush1.bf16.msra.mxu0 %v114
    %139 = vmatprep.subr.bf16.mxu0 0
    %140 = vmatpush1.bf16.msra.mxu0 0
    %141 = vmatprep.subr.bf16.mxu0 0
    %142 = vmatpush1.bf16.msra.mxu0 0
    %143 = vmatprep.subr.bf16.mxu0 0
    %144 = vmatpush1.bf16.msra.mxu0 0
    %145 = vmatprep.subr.bf16.mxu0 0
    %146 = vmatpush1.bf16.msra.mxu0 0
    %147 = vmatprep.subr.bf16.mxu0 0
    %148 = vmatpush1.bf16.msra.mxu0 0
    %149 = vmatprep.subr.bf16.mxu0 0
    %150 = vmatpush1.bf16.msra.mxu0 0
    %151 = vmatprep.subr.bf16.mxu0 0
    %152 = vmatpush1.bf16.msra.mxu0 0
    %153 = vmatprep.subr.bf16.mxu0 0
    %154 = vmatpush1.bf16.msra.mxu0 0
    %155 = vmatprep.mubr.bf16.mxu0 0
    %156 = vmatmul.mubr.bf16.gmra.mrb[0].mxu0 %v51
    %v157 = vpop.f32.mrb[0].mxu0
    %v158 = vadd.f32 %v73, %v157
    %v159 = vpop.f32.mrb[0].mxu0
    %v160 = vpop.f32.mrb[0].mxu0
    %v161 = vadd.f32 %v73, %v160
    %v162 = vpop.f32.mrb[0].mxu0
    %163 = vdwg.mxu0
    %v164 = vmax.f32 %v158, 0.0
    %v165 = vmax.f32 %v161, 0.0
    %v166 = vpack.c.bf16 %v165, %v164
    %v167 = vld [vmem:[#allocation4] sm:$0xf]
    %v168 = vld [vmem:[#allocation4 + $0x4] sm:$0xf]
    %v169 = vld [vmem:[#allocation4 + $0x8] sm:$0xf]
    %v170 = vld [vmem:[#allocation4 + $0xc] sm:$0xf]
    %v171 = vld [vmem:[#allocation4 + $0x10] sm:$0xf]
    %v172 = vld [vmem:[#allocation4 + $0x14] sm:$0xf]
    %v173 = vld [vmem:[#allocation4 + $0x18] sm:$0xf]
    %v174 = vld [vmem:[#allocation4 + $0x1c] sm:$0xf]
    %v175 = vld [vmem:[#allocation4 + $0x20] sm:$0xf]
    %v176 = vld [vmem:[#allocation4 + $0x24] sm:$0xf]
    %v177 = vld [vmem:[#allocation4 + $0x28] sm:$0xf]
    %v178 = vld [vmem:[#allocation4 + $0x2c] sm:$0xf]
    %v179 = vld [vmem:[#allocation4 + $0x30] sm:$0xf]
    %v180 = vld [vmem:[#allocation4 + $0x34] sm:$0xf]
    %v181 = vld [vmem:[#allocation4 + $0x38] sm:$0xf]
    %v182 = vld [vmem:[#allocation4 + $0x3c] sm:$0xf]
    %v183 = vld [vmem:[%s4] sm:$0x7]
    %v184 = vlaneseq
    %v185 = vshrl.u32 %v184, 7
    %v186 = vsub.s32 0, %v185
    %v187 = vrot.slane %v183, %v186
    %v204 = vunpack.c.l.b16 %v167
    %v205 = vunpack.c.l.b16 %v168
    %v206 = vunpack.c.l.b16 %v169
    %v207 = vunpack.c.l.b16 %v170
    %v208 = vunpack.c.l.b16 %v171
    %v209 = vunpack.c.l.b16 %v172
    %v210 = vunpack.c.l.b16 %v173
    %v211 = vunpack.c.l.b16 %v174
    %v212 = vunpack.c.l.b16 %v175
    %v213 = vunpack.c.l.b16 %v176
    %v214 = vunpack.c.l.b16 %v177
    %v215 = vunpack.c.l.b16 %v178
    %v216 = vunpack.c.l.b16 %v179
    %v217 = vunpack.c.l.b16 %v180
    %v218 = vunpack.c.l.b16 %v181
    %v219 = vunpack.c.l.b16 %v182
    %v220 = vpack.c.b16 %v205, %v204
    %v221 = vpack.c.b16 %v207, %v206
    %v222 = vpack.c.b16 %v209, %v208
    %v223 = vpack.c.b16 %v211, %v210
    %v224 = vpack.c.b16 %v213, %v212
    %v225 = vpack.c.b16 %v215, %v214
    %v226 = vpack.c.b16 %v217, %v216
    %v227 = vpack.c.b16 %v219, %v218
    %236 = vmatprep.subr.bf16.mxu0 0
    %237 = vmatpush1.bf16.msra.mxu0 %v220
    %238 = vmatprep.subr.bf16.mxu0 0
    %239 = vmatpush1.bf16.msra.mxu0 %v221
    %240 = vmatprep.subr.bf16.mxu0 0
    %241 = vmatpush1.bf16.msra.mxu0 %v222
    %242 = vmatprep.subr.bf16.mxu0 0
    %243 = vmatpush1.bf16.msra.mxu0 %v223
    %244 = vmatprep.subr.bf16.mxu0 0
    %245 = vmatpush1.bf16.msra.mxu0 %v224
    %246 = vmatprep.subr.bf16.mxu0 0
    %247 = vmatpush1.bf16.msra.mxu0 %v225
    %248 = vmatprep.subr.bf16.mxu0 0
    %249 = vmatpush1.bf16.msra.mxu0 %v226
    %250 = vmatprep.subr.bf16.mxu0 0
    %251 = vmatpush1.bf16.msra.mxu0 %v227
    %252 = vmatprep.subr.bf16.mxu0 0
    %253 = vmatpush1.bf16.msra.mxu0 0
    %254 = vmatprep.subr.bf16.mxu0 0
    %255 = vmatpush1.bf16.msra.mxu0 0
    %256 = vmatprep.subr.bf16.mxu0 0
    %257 = vmatpush1.bf16.msra.mxu0 0
    %258 = vmatprep.subr.bf16.mxu0 0
    %259 = vmatpush1.bf16.msra.mxu0 0
    %260 = vmatprep.subr.bf16.mxu0 0
    %261 = vmatpush1.bf16.msra.mxu0 0
    %262 = vmatprep.subr.bf16.mxu0 0
    %263 = vmatpush1.bf16.msra.mxu0 0
    %264 = vmatprep.subr.bf16.mxu0 0
    %265 = vmatpush1.bf16.msra.mxu0 0
    %266 = vmatprep.subr.bf16.mxu0 0
    %267 = vmatpush1.bf16.msra.mxu0 0
    %268 = vmatprep.mubr.bf16.mxu0 0
    %269 = vmatmul.mubr.bf16.gmra.mrb[0].mxu0 %v166
    %v270 = vpop.f32.mrb[0].mxu0
    %v271 = vadd.f32 %v187, %v270
    %v272 = vpop.f32.mrb[0].mxu0
    %v273 = vpop.f32.mrb[0].mxu0
    %v274 = vadd.f32 %v187, %v273
    %v275 = vpop.f32.mrb[0].mxu0
    %276 = vdwg.mxu0
    %v277 = vadd.f32 %v271, %v49
    %v278 = vadd.f32 %v274, %v50
    %279 = vadd.xlane.f32.xlu0 %v277
    %v280 = vpop.xlane.xlu0 %279
    %281 = vadd.xlane.f32.xlu0 %v278
    %v282 = vpop.xlane.xlu0 %281
    %v283 = vmul.f32 %v280, 0.03125
    %v284 = vmul.f32 %v282, 0.03125
    %v285 = vsub.f32 %v277, %v283
    %v286 = vsub.f32 %v278, %v284
    %v287 = vmul.f32 %v285, %v285
    %v288 = vmul.f32 %v286, %v286
    %289 = vadd.xlane.f32.xlu0 %v287
    %v290 = vpop.xlane.xlu0 %289
    %291 = vadd.xlane.f32.xlu0 %v288
    %v292 = vpop.xlane.xlu0 %291
    %v293 = vmul.f32 %v283, %v283
    %v294 = vmul.f32 %v284, %v284
    %v295 = vmul.f32 %v293, 96.0
    %v296 = vmul.f32 %v294, 96.0
    %v297 = vsub.f32 %v290, %v295
    %v298 = vsub.f32 %v292, %v296
    %v299 = vmul.f32 %v297, 0.03125
    %v300 = vmul.f32 %v298, 0.03125
    %v301 = vmax.f32 %v299, 0.0
    %v302 = vmax.f32 %v300, 0.0
    %v303 = vadd.f32 %v301, 1e-05
    %v304 = vadd.f32 %v302, 1e-05
    %v305 = vrsqrt.pop %v303
    %v306 = vrsqrt.pop %v304
    %v307 = vmul.f32 %v285, %v305
    %v308 = vmul.f32 %v286, %v306
    %v309 = vlaneseq
    %v310 = vshrl.u32 %v309, 7
    %v311 = vsub.s32 1, %v310
    %v312 = vrot.slane %v183, %v311
    %v313 = vmul.f32 %v307, %v312
    %v314 = vmul.f32 %v308, %v312
    %v315 = vlaneseq
    %v316 = vshrl.u32 %v315, 7
    %v317 = vsub.s32 2, %v316
    %v318 = vrot.slane %v183, %v317
    %v319 = vadd.f32 %v313, %v318
    %v320 = vadd.f32 %v314, %v318
    %321 = vst [vmem:[%s5] sm:$0xff] %v319
    %322 = vst [vmem:[%s5 + $0x8] sm:$0xff] %v320
    // Predicated region
    $region30: #{ffn_forward.1} parent=1 // pred_check
      _
    $region31: #{ffn_forward.1} parent=1 // pred_check_branch
      %324 = sbr.rel (0) target = $region33
    $region32: #{ffn_forward.1} parent=1 // pred_region
      _
    $region33: #{ffn_forward.1} parent=1 // pred_fallthru
      _
    // Predicated region
    $region34: #{ffn_forward.1} parent=1 // pred_check
      _
    $region35: #{ffn_forward.1} parent=1 // pred_check_branch
      %326 = sbr.rel (0) target = $region37
    $region36: #{ffn_forward.1} parent=1 // pred_region
      _
    $region37: #{ffn_forward.1} parent=1 // pred_fallthru
      _
    %327 = vsyncpa [#allocation3], 1
    %328 = vsyncpa [#allocation5], 1

</llo_original>
